<compile_context>
chip_gen: v7x
topology: tpu7x:2x2x1
jax: 0.10.0
libtpu: 0.0.40
codegen_flags: <defaults>
</compile_context>

<pallas_src>
import jax
import jax.numpy as jnp
from jax.experimental import pallas as pl
from jax.experimental.pallas import tpu as pltpu

_K1_PAD = 8      # layer-1 contraction dim padded from 4 to 8 (sublane-aligned)
_N_PAD = 128     # logits padded to a full lane width (lane-dense stores)
_BM_MAX = 2048   # max batch-tile rows (sweet spot per tiling curve; ~3 MiB VMEM)
_SUB = 16        # sublane granularity (bf16-packing safe)


def _round_up(x, m):
    return ((x + m - 1) // m) * m


def _choose_tile(B):
    """Returns (BM, B_pad): batch tile rows and total padded batch rows."""
    B_pad = _round_up(max(B, _SUB), _SUB)
    if B_pad <= 128:
        # Tiny / rollout-style batch: one tile; launch overhead dominates anyway.
        return B_pad, B_pad
    # >=2 tiles so the "parallel" batch axis can shard across v7x's two cores;
    # cap tile size at _BM_MAX and keep padding waste to <16 rows per tile.
    n_tiles = max(2, pl.cdiv(B_pad, _BM_MAX))
    bm = min(_BM_MAX, _round_up(pl.cdiv(B_pad, n_tiles), _SUB))
    return bm, _round_up(B_pad, bm)


def _policy_kernel(x_ref, w1_ref, b1_ref, w2_ref, b2_ref, w3_ref, b3_ref, out_ref):
    # x tile: [BM, 8] bf16 (zero-padded features, cast already done in wrapper).
    x = x_ref[...]

    # Layer 1: Linear(8(pad) -> 128) + ReLU   (bf16 operands, f32 accumulate)
    h1 = jnp.dot(x, w1_ref[...], preferred_element_type=jnp.float32) + b1_ref[...]
    h1 = jnp.maximum(h1, 0.0)

    # Layer 2: Linear(128 -> 128) + ReLU
    h2 = jnp.dot(h1.astype(jnp.bfloat16), w2_ref[...],
                 preferred_element_type=jnp.float32) + b2_ref[...]
    h2 = jnp.maximum(h2, 0.0)

    # Layer 3: Linear(128 -> 128(pad)) kept fully in f32 (accuracy of the final
    # log-probs). Padded lanes carry bias = -1e30 so they contribute exp(.)==0
    # to the softmax normalizer and never win the max.
    logits = jnp.dot(h2, w3_ref[...], preferred_element_type=jnp.float32) + b3_ref[...]

    # Numerically stable log_softmax over the padded (lane-dense) last dim.
    m = jnp.max(logits, axis=-1, keepdims=True)
    shifted = logits - m
    lse = jnp.log(jnp.sum(jnp.exp(shifted), axis=-1, keepdims=True))
    out_ref[...] = (shifted - lse).astype(out_ref.dtype)


def prepare_params(params, n_actions):
    """One-time padding / dtype massaging (call once, outside any rollout loop)."""
    w1, b1, w2, b2, w3, b3 = params
    # Layer 1: pad contraction dim 4 -> 8, weights to bf16.
    w1p = jnp.zeros((_K1_PAD, 128), jnp.float32).at[: w1.shape[0], :].set(w1)
    w1p = w1p.astype(jnp.bfloat16)
    # Layer 3: pad output dim n_actions -> 128; padded bias lanes = -1e30.
    # w3/b3 stay f32 (final-layer precision).
    w3p = jnp.zeros((128, _N_PAD), jnp.float32).at[:, :n_actions].set(w3)
    b3p = jnp.full((1, _N_PAD), -1e30, jnp.float32).at[:, :n_actions].set(b3)
    return (
        w1p,
        b1.astype(jnp.float32),
        w2.astype(jnp.bfloat16),
        b2.astype(jnp.float32),
        w3p,
        b3p,
    )


def imitation_policy_forward(state_goal, prepared_params, n_actions):
    """state_goal: [B, 4] float32 -> log-probs [B, n_actions] float32."""
    w1, b1, w2, b2, w3, b3 = prepared_params
    B, F = state_goal.shape

    BM, B_pad = _choose_tile(B)
    grid = (B_pad // BM,)

    # Pad features 4 -> 8, batch B -> B_pad, and cast to bf16 in one fused op
    # (halves the x-tile DMA; padded rows/cols are zeros and get discarded).
    x_pad = jnp.pad(state_goal, ((0, B_pad - B), (0, _K1_PAD - F))).astype(jnp.bfloat16)

    # Advisory cost estimate so XLA overlaps this small call with neighbors.
    cost = pl.CostEstimate(
        flops=2 * B_pad * (_K1_PAD * 128 + 128 * 128 + 128 * _N_PAD),
        transcendentals=B_pad * (_N_PAD + 1),
        bytes_accessed=(
            B_pad * _K1_PAD * 2                         # x (bf16)
            + _K1_PAD * 128 * 2 + 128 * 128 * 2         # w1, w2 (bf16)
            + 128 * _N_PAD * 4                          # w3 (f32)
            + 3 * 128 * 4 + (_N_PAD - 128 + 128) * 4    # biases (f32)
            + B_pad * _N_PAD * 4                        # output (f32)
        ),
    )

    const = lambda i: (0, 0)  # weights / biases: resident across the batch grid
    out_pad = pl.pallas_call(
        _policy_kernel,
        out_shape=jax.ShapeDtypeStruct((B_pad, _N_PAD), jnp.float32),
        grid=grid,
        in_specs=[
            pl.BlockSpec((BM, _K1_PAD), lambda i: (i, 0)),   # x tile (bf16)
            pl.BlockSpec((_K1_PAD, 128), const),             # w1 (bf16)
            pl.BlockSpec((1, 128), const),                   # b1 (f32)
            pl.BlockSpec((128, 128), const),                 # w2 (bf16)
            pl.BlockSpec((1, 128), const),                   # b2 (f32)
            pl.BlockSpec((128, _N_PAD), const),              # w3 (f32, padded)
            pl.BlockSpec((1, _N_PAD), const),                # b3 (f32, padded -1e30)
        ],
        out_specs=pl.BlockSpec((BM, _N_PAD), lambda i: (i, 0)),
        compiler_params=pltpu.CompilerParams(dimension_semantics=("parallel",)),
        cost_estimate=cost,
    )(x_pad, w1, b1, w2, b2, w3, b3)

    # Keep this call (and its consumer) under a single jit so the slice fuses;
    # for maximum throughput hand the padded buffer straight to the sampler
    # and mask lanes >= n_actions there instead.
    return out_pad[:B, :n_actions]


def init_params(key, n_actions=6):
    """Deterministic init mirroring PyTorch's default Linear init (U[-1/sqrt(fan_in), ...])."""
    ks = jax.random.split(key, 6)

    def linear(kw, kb, fan_in, fan_out):
        bound = 1.0 / jnp.sqrt(fan_in)
        w = jax.random.uniform(kw, (fan_in, fan_out), jnp.float32, -bound, bound)
        b = jax.random.uniform(kb, (1, fan_out), jnp.float32, -bound, bound)
        return w, b

    w1, b1 = linear(ks[0], ks[1], 4, 128)
    w2, b2 = linear(ks[2], ks[3], 128, 128)
    w3, b3 = linear(ks[4], ks[5], 128, n_actions)
    return (w1, b1, w2, b2, w3, b3)


def reference_forward(state_goal, params):
    w1, b1, w2, b2, w3, b3 = params
    h1 = jnp.maximum(state_goal @ w1 + b1, 0.0)
    h2 = jnp.maximum(h1 @ w2 + b2, 0.0)
    logits = h2 @ w3 + b3
    return jax.nn.log_softmax(logits, axis=-1)


if __name__ == "__main__":
    key = jax.random.PRNGKey(0)
    k_param, k_x1, k_x2 = jax.random.split(key, 3)

    n_actions = 6
    params = init_params(k_param, n_actions=n_actions)
    prepared = prepare_params(params, n_actions)  # pad/cast once, outside any loop

    fwd = jax.jit(imitation_policy_forward, static_argnums=2)

    def check(x):
        lp = jax.block_until_ready(fwd(x, prepared, n_actions))
        assert lp.shape == (x.shape[0], n_actions)
        # log-softmax rows exponentiate-sum to ~1 (padded lanes contribute 0).
        row_sums = jnp.sum(jnp.exp(lp), axis=-1)
        assert bool(jnp.all(jnp.abs(row_sums - 1.0) < 1e-5))
        # Close to the f32 reference (loose tolerance: bf16 hidden layers).
        ref = reference_forward(x, params)
        assert bool(jnp.max(jnp.abs(lp - ref)) < 5e-2)

    # Small rollout-style batch (single tile path).
    B = 8
    state_goal = jax.random.normal(k_x1, (B, 4), dtype=jnp.float32)  # (cx, cy, gx, gy)
    check(state_goal)

    # Moderate batch (multi-tile / parallel-grid path, non-multiple of the tile).
    check(jax.random.normal(k_x2, (200, 4), dtype=jnp.float32))

    print("KERNEL_OK")
</pallas_src>

<mosaic_0001>
module attributes {stable_mosaic.version = 11 : i64} {
  func.func @_policy_kernel(%arg0: i32, %arg1: memref<16x8xbf16, #tpu.memory_space<vmem>>, %arg2: memref<8x128xbf16, #tpu.memory_space<vmem>>, %arg3: memref<1x128xf32, #tpu.memory_space<vmem>>, %arg4: memref<128x128xbf16, #tpu.memory_space<vmem>>, %arg5: memref<1x128xf32, #tpu.memory_space<vmem>>, %arg6: memref<128x128xf32, #tpu.memory_space<vmem>>, %arg7: memref<1x128xf32, #tpu.memory_space<vmem>>, %arg8: memref<16x128xf32, #tpu.memory_space<vmem>>) attributes {dimension_semantics = [#tpu.dimension_semantics<parallel>], iteration_bounds = array<i64: 1>, scalar_prefetch = 0 : i64, scratch_operands = 0 : i64, tpu.core_type = #tpu.core_type<tc>, window_params = [{transform_indices = @transform_0, window_bounds = array<i64: 16, 8>}, {pipeline_mode = #tpu.pipeline_mode<synchronous>, transform_indices = @transform_1, window_bounds = array<i64: 8, 128>}, {pipeline_mode = #tpu.pipeline_mode<synchronous>, transform_indices = @transform_2, window_bounds = array<i64: 1, 128>}, {pipeline_mode = #tpu.pipeline_mode<synchronous>, transform_indices = @transform_3, window_bounds = array<i64: 128, 128>}, {pipeline_mode = #tpu.pipeline_mode<synchronous>, transform_indices = @transform_4, window_bounds = array<i64: 1, 128>}, {pipeline_mode = #tpu.pipeline_mode<synchronous>, transform_indices = @transform_5, window_bounds = array<i64: 128, 128>}, {pipeline_mode = #tpu.pipeline_mode<synchronous>, transform_indices = @transform_6, window_bounds = array<i64: 1, 128>}, {transform_indices = @transform_7, window_bounds = array<i64: 16, 128>}]} {
    %c0 = arith.constant 0 : index
    %c0_0 = arith.constant 0 : index
    %0 = vector.load %arg1[%c0, %c0_0] : memref<16x8xbf16, #tpu.memory_space<vmem>>, vector<16x8xbf16>
    %c0_1 = arith.constant 0 : index
    %c0_2 = arith.constant 0 : index
    %1 = vector.load %arg2[%c0_1, %c0_2] : memref<8x128xbf16, #tpu.memory_space<vmem>>, vector<8x128xbf16>
    %cst = arith.constant dense<0.000000e+00> : vector<16x128xf32>
    %2 = tpu.matmul %0, %1, %cst {dimension_numbers = #tpu.dot_dimension_numbers<[1], [0], [0], [1], [0, 0, 1, 1], [], []>} : vector<16x8xbf16>, vector<8x128xbf16>, vector<16x128xf32> -> vector<16x128xf32>
    %c0_3 = arith.constant 0 : index
    %c0_4 = arith.constant 0 : index
    %3 = vector.load %arg3[%c0_3, %c0_4] : memref<1x128xf32, #tpu.memory_space<vmem>>, vector<1x128xf32>
    %4 = vector.broadcast %3 : vector<1x128xf32> to vector<16x128xf32>
    %5 = arith.addf %2, %4 : vector<16x128xf32>
    %cst_5 = arith.constant 0.000000e+00 : f32
    %6 = vector.broadcast %cst_5 : f32 to vector<16x128xf32>
    %7 = arith.maximumf %5, %6 : vector<16x128xf32>
    %8 = arith.truncf %7 : vector<16x128xf32> to vector<16x128xbf16>
    %c0_6 = arith.constant 0 : index
    %c0_7 = arith.constant 0 : index
    %9 = vector.load %arg4[%c0_6, %c0_7] : memref<128x128xbf16, #tpu.memory_space<vmem>>, vector<128x128xbf16>
    %cst_8 = arith.constant dense<0.000000e+00> : vector<16x128xf32>
    %10 = tpu.matmul %8, %9, %cst_8 {dimension_numbers = #tpu.dot_dimension_numbers<[1], [0], [0], [1], [0, 0, 1, 1], [], []>} : vector<16x128xbf16>, vector<128x128xbf16>, vector<16x128xf32> -> vector<16x128xf32>
    %c0_9 = arith.constant 0 : index
    %c0_10 = arith.constant 0 : index
    %11 = vector.load %arg5[%c0_9, %c0_10] : memref<1x128xf32, #tpu.memory_space<vmem>>, vector<1x128xf32>
    %12 = vector.broadcast %11 : vector<1x128xf32> to vector<16x128xf32>
    %13 = arith.addf %10, %12 : vector<16x128xf32>
    %cst_11 = arith.constant 0.000000e+00 : f32
    %14 = vector.broadcast %cst_11 : f32 to vector<16x128xf32>
    %15 = arith.maximumf %13, %14 : vector<16x128xf32>
    %c0_12 = arith.constant 0 : index
    %c0_13 = arith.constant 0 : index
    %16 = vector.load %arg6[%c0_12, %c0_13] : memref<128x128xf32, #tpu.memory_space<vmem>>, vector<128x128xf32>
    %cst_14 = arith.constant dense<0.000000e+00> : vector<16x128xf32>
    %17 = tpu.matmul %15, %16, %cst_14 {dimension_numbers = #tpu.dot_dimension_numbers<[1], [0], [0], [1], [0, 0, 1, 1], [], []>} : vector<16x128xf32>, vector<128x128xf32>, vector<16x128xf32> -> vector<16x128xf32>
    %c0_15 = arith.constant 0 : index
    %c0_16 = arith.constant 0 : index
    %18 = vector.load %arg7[%c0_15, %c0_16] : memref<1x128xf32, #tpu.memory_space<vmem>>, vector<1x128xf32>
    %19 = vector.broadcast %18 : vector<1x128xf32> to vector<16x128xf32>
    %20 = arith.addf %17, %19 : vector<16x128xf32>
    %cst_17 = arith.constant dense<0xFF800000> : vector<16xf32>
    %21 = vector.multi_reduction <maximumf>, %20, %cst_17 [1] : vector<16x128xf32> to vector<16xf32>
    %22 = vector.shape_cast %21 : vector<16xf32> to vector<16x1xf32>
    %23 = vector.broadcast %22 : vector<16x1xf32> to vector<16x128xf32>
    %24 = arith.subf %20, %23 : vector<16x128xf32>
    %25 = math.exp %24 : vector<16x128xf32>
    %cst_18 = arith.constant dense<0.000000e+00> : vector<16xf32>
    %26 = vector.multi_reduction <add>, %25, %cst_18 [1] : vector<16x128xf32> to vector<16xf32>
    %27 = vector.shape_cast %26 : vector<16xf32> to vector<16x1xf32>
    %28 = math.log %27 : vector<16x1xf32>
    %29 = vector.broadcast %28 : vector<16x1xf32> to vector<16x128xf32>
    %30 = arith.subf %24, %29 : vector<16x128xf32>
    %c0_19 = arith.constant 0 : index
    %c0_20 = arith.constant 0 : index
    %31 = vector.load %arg8[%c0_19, %c0_20] : memref<16x128xf32, #tpu.memory_space<vmem>>, vector<16x128xf32>
    tpu.vector_store %arg8[%c0_19, %c0_20], %30 {strides = array<i32>} : memref<16x128xf32, #tpu.memory_space<vmem>>, vector<16x128xf32>,
    return
  }
  func.func @transform_0(%arg0: i32) -> (i32, i32) {
    %c0_i32 = arith.constant 0 : i32
    %c0_i32_0 = arith.constant 0 : i32
    return %arg0, %c0_i32 : i32, i32
  }
  func.func @transform_1(%arg0: i32) -> (i32, i32) {
    %c0_i32 = arith.constant 0 : i32
    %c0_i32_0 = arith.constant 0 : i32
    %c0_i32_1 = arith.constant 0 : i32
    return %c0_i32, %c0_i32_0 : i32, i32
  }
  func.func @transform_2(%arg0: i32) -> (i32, i32) {
    %c0_i32 = arith.constant 0 : i32
    %c0_i32_0 = arith.constant 0 : i32
    %c0_i32_1 = arith.constant 0 : i32
    return %c0_i32, %c0_i32_0 : i32, i32
  }
  func.func @transform_3(%arg0: i32) -> (i32, i32) {
    %c0_i32 = arith.constant 0 : i32
    %c0_i32_0 = arith.constant 0 : i32
    %c0_i32_1 = arith.constant 0 : i32
    return %c0_i32, %c0_i32_0 : i32, i32
  }
  func.func @transform_4(%arg0: i32) -> (i32, i32) {
    %c0_i32 = arith.constant 0 : i32
    %c0_i32_0 = arith.constant 0 : i32
    %c0_i32_1 = arith.constant 0 : i32
    return %c0_i32, %c0_i32_0 : i32, i32
  }
  func.func @transform_5(%arg0: i32) -> (i32, i32) {
    %c0_i32 = arith.constant 0 : i32
    %c0_i32_0 = arith.constant 0 : i32
    %c0_i32_1 = arith.constant 0 : i32
    return %c0_i32, %c0_i32_0 : i32, i32
  }
  func.func @transform_6(%arg0: i32) -> (i32, i32) {
    %c0_i32 = arith.constant 0 : i32
    %c0_i32_0 = arith.constant 0 : i32
    %c0_i32_1 = arith.constant 0 : i32
    return %c0_i32, %c0_i32_0 : i32, i32
  }
  func.func @transform_7(%arg0: i32) -> (i32, i32) {
    %c0_i32 = arith.constant 0 : i32
    %c0_i32_0 = arith.constant 0 : i32
    return %arg0, %c0_i32 : i32, i32
  }
}

</mosaic_0001>

<llo_original>
// kernel: imitation_policy_forward.1
$region0: #{imitation_policy_forward.1}
  #allocation0 [shape = 'u32[]', space=smem, size = 0x4, offset = 0x4, fixed_abs, tag = 'smem constant byte address 0x4 - core index']
  #allocation1 [shape = 'u32[144,128]{1,0:T(1,128)}', space=vmem, size = 0x12000, scoped, tag = 'internal scratch']
  %s0 = inlined_call_operand.vmem [shape: bf16[16,8], index: 0, kind: input, shape index: {}]
  %s1 = inlined_call_operand.vmem [shape: bf16[8,128], index: 1, kind: input, shape index: {}]
  %s2 = inlined_call_operand.vmem [shape: f32[1,128], index: 2, kind: input, shape index: {}]
  %s3 = inlined_call_operand.hbm [shape: bf16[128,128], index: 3, kind: input, shape index: {}]
  %s4 = inlined_call_operand.vmem [shape: f32[1,128], index: 4, kind: input, shape index: {}]
  %s5 = inlined_call_operand.hbm [shape: f32[128,128], index: 5, kind: input, shape index: {}]
  %s6 = inlined_call_operand.vmem [shape: f32[1,128], index: 6, kind: input, shape index: {}]
  %s7 = inlined_call_operand.vmem [shape: f32[16,128], index: 7, kind: output, shape index: {}]
  %s8 = sld [smem:[#allocation0]]
  $region46: #{imitation_policy_forward.1} parent=0
    _
  %s10 = ssub.s32 1, %s8
  %s11 = scalar_select 0, %s10, %s8
  $region1: #{imitation_policy_forward.1} parent=0
    #allocation2 [shape = 'u8[32768]{0}', space=vmem, size = 0x8000, scoped, tag = 'input window, operand 3, single buffered']
    #allocation3 [shape = 's32[1]{0}', space=sflag, size = 0x4, scoped, tag = 'scoped memory for imitation_policy_forward.1']
    #allocation4 [shape = 'u8[65536]{0}', space=vmem, size = 0x10000, scoped, tag = 'input window, operand 5, single buffered']
    #allocation5 [shape = 's32[1]{0}', space=sflag, size = 0x4, scoped, tag = 'scoped memory for imitation_policy_forward.1']
    %12 = vsyncpa [#allocation3], 0
    %13 = vsyncpa [#allocation5], 0
    // Predicated region
    $region2: #{imitation_policy_forward.1} parent=1 // pred_check
      _
    $region3: #{imitation_policy_forward.1} parent=1 // pred_check_branch
      %15 = sbr.rel (0) target = $region5
    $region4: #{imitation_policy_forward.1} parent=1 // pred_region
      _
    $region5: #{imitation_policy_forward.1} parent=1 // pred_fallthru
      _
    // Predicated region
    $region6: #{imitation_policy_forward.1} parent=1 // pred_check
      _
    $region7: #{imitation_policy_forward.1} parent=1 // pred_check_branch
      %17 = sbr.rel (0) target = $region9
    $region8: #{imitation_policy_forward.1} parent=1 // pred_region
      _
    $region9: #{imitation_policy_forward.1} parent=1 // pred_fallthru
      _
    // Predicated region
    $region10: #{imitation_policy_forward.1} parent=1 // pred_check
      _
    $region11: #{imitation_policy_forward.1} parent=1 // pred_check_branch
      %19 = sbr.rel (0) target = $region13
    $region12: #{imitation_policy_forward.1} parent=1 // pred_region
      _
    $region13: #{imitation_policy_forward.1} parent=1 // pred_fallthru
      _
    // Predicated region
    $region14: #{imitation_policy_forward.1} parent=1 // pred_check
      _
    $region15: #{imitation_policy_forward.1} parent=1 // pred_check_branch
      %21 = sbr.rel (0) target = $region17
    $region16: #{imitation_policy_forward.1} parent=1 // pred_region
      %s23 = ssub.s32 1024, 1024
      %24 = vsyncadd [#allocation3], %s23
      %s25 = sshll.u32 [#allocation2], 4
      %s26 = int_to_ptr.vmem [resolvable:$true] %s25
      %31 = dma.hbm_to_vmem [thread:$0]  %s3, 1024, %s26, [#allocation3], 64, 64, 4
    $region17: #{imitation_policy_forward.1} parent=1 // pred_fallthru
      _
    // Predicated region
    $region18: #{imitation_policy_forward.1} parent=1 // pred_check
      _
    $region19: #{imitation_policy_forward.1} parent=1 // pred_check_branch
      %33 = sbr.rel (0) target = $region21
    $region20: #{imitation_policy_forward.1} parent=1 // pred_region
      _
    $region21: #{imitation_policy_forward.1} parent=1 // pred_fallthru
      _
    // Predicated region
    $region22: #{imitation_policy_forward.1} parent=1 // pred_check
      _
    $region23: #{imitation_policy_forward.1} parent=1 // pred_check_branch
      %35 = sbr.rel (0) target = $region25
    $region24: #{imitation_policy_forward.1} parent=1 // pred_region
      %s37 = ssub.s32 2048, 2048
      %38 = vsyncadd [#allocation5], %s37
      %s39 = sshll.u32 [#allocation4], 4
      %s40 = int_to_ptr.vmem [resolvable:$true] %s39
      %45 = dma.hbm_to_vmem [thread:$0]  %s5, 2048, %s40, [#allocation5], 128, 128, 8
    $region25: #{imitation_policy_forward.1} parent=1 // pred_fallthru
      _
    // Predicated region
    $region26: #{imitation_policy_forward.1} parent=1 // pred_check
      _
    $region27: #{imitation_policy_forward.1} parent=1 // pred_check_branch
      %47 = sbr.rel (0) target = $region29
    $region28: #{imitation_policy_forward.1} parent=1 // pred_region
      _
    $region29: #{imitation_policy_forward.1} parent=1 // pred_fallthru
      _
    // Predicated region
    $region30: #{imitation_policy_forward.1} parent=1 // pred_check
      _
    $region31: #{imitation_policy_forward.1} parent=1 // pred_check_branch
      %49 = sbr.rel (0) target = $region33
    $region32: #{imitation_policy_forward.1} parent=1 // pred_region
      %50 = dma.done [#allocation3], 1024
    $region33: #{imitation_policy_forward.1} parent=1 // pred_fallthru
      _
    // Predicated region
    $region34: #{imitation_policy_forward.1} parent=1 // pred_check
      _
    $region35: #{imitation_policy_forward.1} parent=1 // pred_check_branch
      %52 = sbr.rel (0) target = $region37
    $region36: #{imitation_policy_forward.1} parent=1 // pred_region
      %53 = dma.done [#allocation5], 2048
    $region37: #{imitation_policy_forward.1} parent=1 // pred_fallthru
      _
    %v55 = vld [vmem:[%s0] sm:$0xf]
    %v56 = vld [vmem:[%s0 + $0x4] sm:$0xf]
    %v57 = vld [vmem:[%s1] sm:$0xf]
    %v58 = vld [vmem:[%s2] sm:$0x1]
    %v60 = vlaneseq
    %v61 = vshrl.u32 %v60, 7
    %v62 = vsub.s32 0, %v61
    %v63 = vrot.slane %v58, %v62
    %v67 = vunpack.c.l.b16 %v55
    %v68 = vunpack.c.l.b16 %v56
    %v69 = vpack.c.b16 %v68, %v67
    %vm70 = vcmask 64512
    %v72 = vsel %vm70, %v69, 0
    %vm74 = vcmask 1043456
    %v76 = vsel %vm74, %v57, 0
    %78 = vmatprep.subr.bf16.mxu0 0
    %79 = vmatpush1.bf16.msra.mxu0 %v76
    %80 = vmatprep.subr.bf16.mxu0 0
    %81 = vmatpush1.bf16.msra.mxu0 0
    %82 = vmatprep.subr.bf16.mxu0 0
    %83 = vmatpush1.bf16.msra.mxu0 0
    %84 = vmatprep.subr.bf16.mxu0 0
    %85 = vmatpush1.bf16.msra.mxu0 0
    %86 = vmatprep.subr.bf16.mxu0 0
    %87 = vmatpush1.bf16.msra.mxu0 0
    %88 = vmatprep.subr.bf16.mxu0 0
    %89 = vmatpush1.bf16.msra.mxu0 0
    %90 = vmatprep.subr.bf16.mxu0 0
    %91 = vmatpush1.bf16.msra.mxu0 0
    %92 = vmatprep.subr.bf16.mxu0 0
    %93 = vmatpush1.bf16.msra.mxu0 0
    %94 = vmatprep.subr.bf16.mxu0 0
    %95 = vmatpush1.bf16.msra.mxu0 0
    %96 = vmatprep.subr.bf16.mxu0 0
    %97 = vmatpush1.bf16.msra.mxu0 0
    %98 = vmatprep.subr.bf16.mxu0 0
    %99 = vmatpush1.bf16.msra.mxu0 0
    %100 = vmatprep.subr.bf16.mxu0 0
    %101 = vmatpush1.bf16.msra.mxu0 0
    %102 = vmatprep.subr.bf16.mxu0 0
    %103 = vmatpush1.bf16.msra.mxu0 0
    %104 = vmatprep.subr.bf16.mxu0 0
    %105 = vmatpush1.bf16.msra.mxu0 0
    %106 = vmatprep.subr.bf16.mxu0 0
    %107 = vmatpush1.bf16.msra.mxu0 0
    %108 = vmatprep.subr.bf16.mxu0 0
    %109 = vmatpush1.bf16.msra.mxu0 0
    %110 = vmatprep.mubr.bf16.mxu0 0
    %111 = vmatmul.mubr.bf16.gmra.mrb[0].mxu0 %v72
    %v112 = vpop.f32.mrb[0].mxu0
    %v113 = vadd.f32 %v63, %v112
    %v114 = vpop.f32.mrb[0].mxu0
    %v115 = vpop.f32.mrb[0].mxu0
    %v116 = vadd.f32 %v63, %v115
    %v117 = vpop.f32.mrb[0].mxu0
    %118 = vdwg.mxu0
    %v119 = vmax.f32 %v113, 0.0
    %v120 = vmax.f32 %v116, 0.0
    %v121 = vpack.c.bf16 %v120, %v119
    %v122 = vld [vmem:[#allocation2] sm:$0xf]
    %v123 = vld [vmem:[#allocation2 + $0x4] sm:$0xf]
    %v124 = vld [vmem:[#allocation2 + $0x8] sm:$0xf]
    %v125 = vld [vmem:[#allocation2 + $0xc] sm:$0xf]
    %v126 = vld [vmem:[#allocation2 + $0x10] sm:$0xf]
    %v127 = vld [vmem:[#allocation2 + $0x14] sm:$0xf]
    %v128 = vld [vmem:[#allocation2 + $0x18] sm:$0xf]
    %v129 = vld [vmem:[#allocation2 + $0x1c] sm:$0xf]
    %v130 = vld [vmem:[#allocation2 + $0x20] sm:$0xf]
    %v131 = vld [vmem:[#allocation2 + $0x24] sm:$0xf]
    %v132 = vld [vmem:[#allocation2 + $0x28] sm:$0xf]
    %v133 = vld [vmem:[#allocation2 + $0x2c] sm:$0xf]
    %v134 = vld [vmem:[#allocation2 + $0x30] sm:$0xf]
    %v135 = vld [vmem:[#allocation2 + $0x34] sm:$0xf]
    %v136 = vld [vmem:[#allocation2 + $0x38] sm:$0xf]
    %v137 = vld [vmem:[#allocation2 + $0x3c] sm:$0xf]
    %v138 = vld [vmem:[%s4] sm:$0x1]
    %v140 = vlaneseq
    %v141 = vshrl.u32 %v140, 7
    %v142 = vsub.s32 0, %v141
    %v143 = vrot.slane %v138, %v142
    %v161 = vunpack.c.l.b16 %v122
    %v162 = vunpack.c.l.b16 %v123
    %v163 = vunpack.c.l.b16 %v124
    %v164 = vunpack.c.l.b16 %v125
    %v165 = vunpack.c.l.b16 %v126
    %v166 = vunpack.c.l.b16 %v127
    %v167 = vunpack.c.l.b16 %v128
    %v168 = vunpack.c.l.b16 %v129
    %v169 = vunpack.c.l.b16 %v130
    %v170 = vunpack.c.l.b16 %v131
    %v171 = vunpack.c.l.b16 %v132
    %v172 = vunpack.c.l.b16 %v133
    %v173 = vunpack.c.l.b16 %v134
    %v174 = vunpack.c.l.b16 %v135
    %v175 = vunpack.c.l.b16 %v136
    %v176 = vunpack.c.l.b16 %v137
    %v177 = vpack.c.b16 %v162, %v161
    %v178 = vpack.c.b16 %v164, %v163
    %v179 = vpack.c.b16 %v166, %v165
    %v180 = vpack.c.b16 %v168, %v167
    %v181 = vpack.c.b16 %v170, %v169
    %v182 = vpack.c.b16 %v172, %v171
    %v183 = vpack.c.b16 %v174, %v173
    %v184 = vpack.c.b16 %v176, %v175
    %193 = vmatprep.subr.bf16.mxu0 0
    %194 = vmatpush1.bf16.msra.mxu0 %v177
    %195 = vmatprep.subr.bf16.mxu0 0
    %196 = vmatpush1.bf16.msra.mxu0 %v178
    %197 = vmatprep.subr.bf16.mxu0 0
    %198 = vmatpush1.bf16.msra.mxu0 %v179
    %199 = vmatprep.subr.bf16.mxu0 0
    %200 = vmatpush1.bf16.msra.mxu0 %v180
    %201 = vmatprep.subr.bf16.mxu0 0
    %202 = vmatpush1.bf16.msra.mxu0 %v181
    %203 = vmatprep.subr.bf16.mxu0 0
    %204 = vmatpush1.bf16.msra.mxu0 %v182
    %205 = vmatprep.subr.bf16.mxu0 0
    %206 = vmatpush1.bf16.msra.mxu0 %v183
    %207 = vmatprep.subr.bf16.mxu0 0
    %208 = vmatpush1.bf16.msra.mxu0 %v184
    %209 = vmatprep.subr.bf16.mxu0 0
    %210 = vmatpush1.bf16.msra.mxu0 0
    %211 = vmatprep.subr.bf16.mxu0 0
    %212 = vmatpush1.bf16.msra.mxu0 0
    %213 = vmatprep.subr.bf16.mxu0 0
    %214 = vmatpush1.bf16.msra.mxu0 0
    %215 = vmatprep.subr.bf16.mxu0 0
    %216 = vmatpush1.bf16.msra.mxu0 0
    %217 = vmatprep.subr.bf16.mxu0 0
    %218 = vmatpush1.bf16.msra.mxu0 0
    %219 = vmatprep.subr.bf16.mxu0 0
    %220 = vmatpush1.bf16.msra.mxu0 0
    %221 = vmatprep.subr.bf16.mxu0 0
    %222 = vmatpush1.bf16.msra.mxu0 0
    %223 = vmatprep.subr.bf16.mxu0 0
    %224 = vmatpush1.bf16.msra.mxu0 0
    %225 = vmatprep.mubr.bf16.mxu0 0
    %226 = vmatmul.mubr.bf16.gmra.mrb[0].mxu0 %v121
    %v227 = vpop.f32.mrb[0].mxu0
    %v228 = vadd.f32 %v143, %v227
    %v229 = vpop.f32.mrb[0].mxu0
    %v230 = vpop.f32.mrb[0].mxu0
    %v231 = vadd.f32 %v143, %v230
    %v232 = vpop.f32.mrb[0].mxu0
    %233 = vdwg.mxu0
    %v234 = vmax.f32 %v228, 0.0
    %v235 = vmax.f32 %v231, 0.0
    %v236 = vld [vmem:[#allocation4] sm:$0xff]
    %v237 = vld [vmem:[#allocation4 + $0x8] sm:$0xff]
    %v238 = vld [vmem:[#allocation4 + $0x10] sm:$0xff]
    %v239 = vld [vmem:[#allocation4 + $0x18] sm:$0xff]
    %v240 = vld [vmem:[#allocation4 + $0x20] sm:$0xff]
    %v241 = vld [vmem:[#allocation4 + $0x28] sm:$0xff]
    %v242 = vld [vmem:[#allocation4 + $0x30] sm:$0xff]
    %v243 = vld [vmem:[#allocation4 + $0x38] sm:$0xff]
    %v244 = vld [vmem:[#allocation4 + $0x40] sm:$0xff]
    %v245 = vld [vmem:[#allocation4 + $0x48] sm:$0xff]
    %v246 = vld [vmem:[#allocation4 + $0x50] sm:$0xff]
    %v247 = vld [vmem:[#allocation4 + $0x58] sm:$0xff]
    %v248 = vld [vmem:[#allocation4 + $0x60] sm:$0xff]
    %v249 = vld [vmem:[#allocation4 + $0x68] sm:$0xff]
    %v250 = vld [vmem:[#allocation4 + $0x70] sm:$0xff]
    %v251 = vld [vmem:[#allocation4 + $0x78] sm:$0xff]
    %v252 = vld [vmem:[%s6] sm:$0x1]
    %v254 = vlaneseq
    %v255 = vshrl.u32 %v254, 7
    %v256 = vsub.s32 0, %v255
    %v257 = vrot.slane %v252, %v256
    %259 = vmatprep.subr.mxu0 0.0
    %260 = vmatpush1.msra.mxu0 %v236
    %261 = vmatprep.subr.mxu0 0.0
    %262 = vmatpush1.msra.mxu0 %v237
    %263 = vmatprep.subr.mxu0 0.0
    %264 = vmatpush1.msra.mxu0 %v238
    %265 = vmatprep.subr.mxu0 0.0
    %266 = vmatpush1.msra.mxu0 %v239
    %267 = vmatprep.subr.mxu0 0.0
    %268 = vmatpush1.msra.mxu0 %v240
    %269 = vmatprep.subr.mxu0 0.0
    %270 = vmatpush1.msra.mxu0 %v241
    %271 = vmatprep.subr.mxu0 0.0
    %272 = vmatpush1.msra.mxu0 %v242
    %273 = vmatprep.subr.mxu0 0.0
    %274 = vmatpush1.msra.mxu0 %v243
    %275 = vmatprep.subr.mxu0 0.0
    %276 = vmatpush1.msra.mxu0 %v244
    %277 = vmatprep.subr.mxu0 0.0
    %278 = vmatpush1.msra.mxu0 %v245
    %279 = vmatprep.subr.mxu0 0.0
    %280 = vmatpush1.msra.mxu0 %v246
    %281 = vmatprep.subr.mxu0 0.0
    %282 = vmatpush1.msra.mxu0 %v247
    %283 = vmatprep.subr.mxu0 0.0
    %284 = vmatpush1.msra.mxu0 %v248
    %285 = vmatprep.subr.mxu0 0.0
    %286 = vmatpush1.msra.mxu0 %v249
    %287 = vmatprep.subr.mxu0 0.0
    %288 = vmatpush1.msra.mxu0 %v250
    %289 = vmatprep.subr.mxu0 0.0
    %290 = vmatpush1.msra.mxu0 %v251
    %291 = vmatprep.subr.mxu0 0.0
    %292 = vmatpush1.msra.mxu0 0.0
    %293 = vmatprep.subr.mxu0 0.0
    %294 = vmatpush1.msra.mxu0 0.0
    %295 = vmatprep.subr.mxu0 0.0
    %296 = vmatpush1.msra.mxu0 0.0
    %297 = vmatprep.subr.mxu0 0.0
    %298 = vmatpush1.msra.mxu0 0.0
    %299 = vmatprep.subr.mxu0 0.0
    %300 = vmatpush1.msra.mxu0 0.0
    %301 = vmatprep.subr.mxu0 0.0
    %302 = vmatpush1.msra.mxu0 0.0
    %303 = vmatprep.subr.mxu0 0.0
    %304 = vmatpush1.msra.mxu0 0.0
    %305 = vmatprep.subr.mxu0 0.0
    %306 = vmatpush1.msra.mxu0 0.0
    %307 = vmatprep.subr.mxu0 0.0
    %308 = vmatpush1.msra.mxu0 0.0
    %309 = vmatprep.subr.mxu0 0.0
    %310 = vmatpush1.msra.mxu0 0.0
    %311 = vmatprep.subr.mxu0 0.0
    %312 = vmatpush1.msra.mxu0 0.0
    %313 = vmatprep.subr.mxu0 0.0
    %314 = vmatpush1.msra.mxu0 0.0
    %315 = vmatprep.subr.mxu0 0.0
    %316 = vmatpush1.msra.mxu0 0.0
    %317 = vmatprep.subr.mxu0 0.0
    %318 = vmatpush1.msra.mxu0 0.0
    %319 = vmatprep.subr.mxu0 0.0
    %320 = vmatpush1.msra.mxu0 0.0
    %321 = vmatprep.subr.mxu0 0.0
    %322 = vmatpush1.msra.mxu0 0.0
    %323 = vmatprep.mubr.f32.mxu0 0.0
    %324 = vmatmul.mubr.f32.gmra.mrb[0].mxu0 %v234
    %v325 = vpop.f32.mrb[0].mxu0
    %v326 = vadd.f32 %v257, %v325
    %v327 = vpop.f32.mrb[0].mxu0
    %328 = vmatprep.mubr.f32.mxu0 0.0
    %329 = vmatmul.mubr.f32.gmra.mrb[0].mxu0 %v235
    %v330 = vpop.f32.mrb[0].mxu0
    %v331 = vadd.f32 %v257, %v330
    %v332 = vpop.f32.mrb[0].mxu0
    %333 = vdwg.mxu0
    %334 = vmax.xlane.f32.xlu0 %v326
    %v335 = vpop.xlane.xlu0 %334
    %336 = vmax.xlane.f32.xlu0 %v331
    %v337 = vpop.xlane.xlu0 %336
    %v338 = vsub.f32 %v326, %v335
    %v339 = vsub.f32 %v331, %v337
    %v340 = vmul.f32 %v338, 1.442695
    %v341 = vpow.pop %v340
    %v342 = vmul.f32 %v339, 1.442695
    %v343 = vpow.pop %v342
    %344 = vadd.xlane.f32.xlu0 %v341
    %v345 = vpop.xlane.xlu0 %344
    %346 = vadd.xlane.f32.xlu0 %v343
    %v347 = vpop.xlane.xlu0 %346
    %v348 = vlog2.pop %v345
    %v349 = vmul.f32 %v348, 0.6931472
    %v350 = vlog2.pop %v347
    %v351 = vmul.f32 %v350, 0.6931472
    %v352 = vsub.f32 %v338, %v349
    %v353 = vsub.f32 %v339, %v351
    %354 = vst [vmem:[%s7] sm:$0xff] %v352
    %355 = vst [vmem:[%s7 + $0x8] sm:$0xff] %v353
    // Predicated region
    $region38: #{imitation_policy_forward.1} parent=1 // pred_check
      _
    $region39: #{imitation_policy_forward.1} parent=1 // pred_check_branch
      %357 = sbr.rel (0) target = $region41
    $region40: #{imitation_policy_forward.1} parent=1 // pred_region
      _
    $region41: #{imitation_policy_forward.1} parent=1 // pred_fallthru
      _
    // Predicated region
    $region42: #{imitation_policy_forward.1} parent=1 // pred_check
      _
    $region43: #{imitation_policy_forward.1} parent=1 // pred_check_branch
      %359 = sbr.rel (0) target = $region45
    $region44: #{imitation_policy_forward.1} parent=1 // pred_region
      _
    $region45: #{imitation_policy_forward.1} parent=1 // pred_fallthru
      _
    %360 = vsyncpa [#allocation3], 1
    %361 = vsyncpa [#allocation5], 1

</llo_original>
